<compile_context>
chip_gen: v5e
topology: v5e:2x2
jax: 0.10.0
libtpu: 0.0.40
codegen_flags: <defaults>
</compile_context>

<pallas_src>
import functools

import jax
import jax.numpy as jnp
from jax.experimental import pallas as pl
from jax.experimental.pallas import tpu as pltpu

IN_DIM = 256
HID_DIM = 512
OUT_DIM = 512


def _round_up(x: int, m: int) -> int:
    return ((x + m - 1) // m) * m


def _cdiv(a: int, b: int) -> int:
    return (a + b - 1) // b


def toy_mlp_kernel(x_ref, w1_ref, b1_ref, w2_ref, b2_ref, o_ref):
    # x_ref:  (tb, IN_DIM)       caller dtype (f32 here)
    # w1_ref: (IN_DIM, HID_DIM)  bf16 (or f32)   -- grid-invariant (resident)
    # b1_ref: (1, HID_DIM)       f32             -- grid-invariant
    # w2_ref: (HID_DIM, OUT_DIM) bf16 (or f32)   -- grid-invariant
    # b2_ref: (1, OUT_DIM)       f32             -- grid-invariant
    # o_ref:  (tb, OUT_DIM)      bf16 (default) or f32
    mm_dtype = w1_ref.dtype
    # Cast activations to the matmul dtype on the VPU (cheap, hidden under the MXU)
    # instead of a standalone astype pass in HBM before the kernel.
    x = x_ref[...].astype(mm_dtype)
    # First Linear on the MXU with f32 accumulation; bias + ReLU stay in f32 (VPU).
    h = jnp.dot(x, w1_ref[...], preferred_element_type=jnp.float32)
    h = jnp.maximum(h + b1_ref[...], 0.0)
    # Second Linear: feed the matmul in the weight dtype, accumulate in f32.
    y = jnp.dot(h.astype(mm_dtype), w2_ref[...], preferred_element_type=jnp.float32)
    o_ref[...] = (y + b2_ref[...]).astype(o_ref.dtype)


def prepare_params(w1_pt, b1, w2_pt, b2, *, use_bf16=True):
    """One-time conversion of PyTorch-layout params to kernel layout.

    w1_pt: [HID_DIM, IN_DIM], w2_pt: [OUT_DIM, HID_DIM] (PyTorch nn.Linear layout).
    Returns (w1 [IN,HID] mm_dtype, b1 [1,HID] f32, w2 [HID,OUT] mm_dtype, b2 [1,OUT] f32).
    Do this once outside the per-call hot path so forward() does no weight casts.
    """
    mm_dtype = jnp.bfloat16 if use_bf16 else jnp.float32
    w1 = jnp.asarray(w1_pt).T.astype(mm_dtype)
    w2 = jnp.asarray(w2_pt).T.astype(mm_dtype)
    b1_2d = jnp.asarray(b1, jnp.float32).reshape(1, HID_DIM)
    b2_2d = jnp.asarray(b2, jnp.float32).reshape(1, OUT_DIM)
    return w1, b1_2d, w2, b2_2d


@functools.partial(jax.jit, static_argnames=("tile_b", "out_dtype"))
def toy_model_forward(x, w1, b1, w2, b2, *, tile_b=1024, out_dtype=jnp.bfloat16):
    """x: [B, 256]; w1: [256, 512]; b1: [1, 512]; w2: [512, 512]; b2: [1, 512] -> [B, 512]."""
    B = x.shape[0]
    out_dtype = jnp.dtype(out_dtype)

    # Sublane packing: 16 rows when any bf16 block is involved, else 8.
    any_bf16 = (w1.dtype == jnp.bfloat16) or (out_dtype == jnp.dtype(jnp.bfloat16))
    row_mult = 16 if any_bf16 else 8

    tb = int(tile_b)
    if B >= 2 * row_mult:
        # v7x has 2 TensorCores; keep at least 2 grid steps so "parallel" can shard.
        tb = min(tb, _round_up(_cdiv(B, 2), row_mult))
    tb = min(tb, _round_up(B, row_mult))        # never over-pad tiny batches
    tb = _round_up(max(tb, row_mult), row_mult)
    if tb >= 128:
        tb = _round_up(tb, 128)                 # v5e: full-height 128-row MXU passes
    grid_b = _cdiv(B, tb)                       # ragged edge handled by Pallas masking

    flops = 2 * grid_b * tb * (IN_DIM * HID_DIM + HID_DIM * OUT_DIM)
    bytes_accessed = (
        B * IN_DIM * x.dtype.itemsize                               # activations in
        + IN_DIM * HID_DIM * w1.dtype.itemsize                      # weights
        + HID_DIM * OUT_DIM * w2.dtype.itemsize
        + (HID_DIM + OUT_DIM) * 4                                   # biases (f32)
        + B * OUT_DIM * out_dtype.itemsize                          # output
    )

    return pl.pallas_call(
        toy_mlp_kernel,
        out_shape=jax.ShapeDtypeStruct((B, OUT_DIM), out_dtype),
        grid_spec=pltpu.PrefetchScalarGridSpec(
            num_scalar_prefetch=0,
            grid=(grid_b,),
            in_specs=[
                pl.BlockSpec((tb, IN_DIM), lambda i: (i, 0)),
                pl.BlockSpec((IN_DIM, HID_DIM), lambda i: (0, 0)),
                pl.BlockSpec((1, HID_DIM), lambda i: (0, 0)),
                pl.BlockSpec((HID_DIM, OUT_DIM), lambda i: (0, 0)),
                pl.BlockSpec((1, OUT_DIM), lambda i: (0, 0)),
            ],
            out_specs=pl.BlockSpec((tb, OUT_DIM), lambda i: (i, 0)),
        ),
        compiler_params=pltpu.CompilerParams(
            dimension_semantics=("parallel",),
        ),
        cost_estimate=pl.CostEstimate(
            flops=flops, transcendentals=0, bytes_accessed=bytes_accessed),
    )(x, w1, b1, w2, b2)


if __name__ == "__main__":
    key = jax.random.PRNGKey(0)
    k_x, k_w1, k_b1, k_w2, k_b2 = jax.random.split(key, 5)

    # Deterministic params mimicking nn.Linear init: weight [out, in],
    # uniform(-1/sqrt(fan_in), 1/sqrt(fan_in)).
    bound1 = IN_DIM ** -0.5
    bound2 = HID_DIM ** -0.5
    w1_pt = jax.random.uniform(k_w1, (HID_DIM, IN_DIM), jnp.float32, -bound1, bound1)
    b1 = jax.random.uniform(k_b1, (HID_DIM,), jnp.float32, -bound1, bound1)
    w2_pt = jax.random.uniform(k_w2, (OUT_DIM, HID_DIM), jnp.float32, -bound2, bound2)
    b2 = jax.random.uniform(k_b2, (OUT_DIM,), jnp.float32, -bound2, bound2)

    # One-time parameter prep (outside the hot path).
    w1k, b1k, w2k, b2k = prepare_params(w1_pt, b1, w2_pt, b2, use_bf16=True)

    def ref_f32(xx):  # exact f32 math of the PyTorch module
        h = jnp.maximum(xx @ w1_pt.T + b1, 0.0)
        return h @ w2_pt.T + b2

    def ref_mirror(xx):  # mirrors kernel precision: bf16 operands, f32 accumulate
        h = jnp.dot(xx.astype(jnp.bfloat16), w1k, preferred_element_type=jnp.float32) + b1
        h = jnp.maximum(h, 0.0)
        return jnp.dot(h.astype(jnp.bfloat16), w2k, preferred_element_type=jnp.float32) + b2

    # --- small batch, default bf16 output ---
    x8 = jax.random.normal(k_x, (8, IN_DIM), dtype=jnp.float32)
    out8 = jax.block_until_ready(toy_model_forward(x8, w1k, b1k, w2k, b2k))
    assert out8.shape == (8, OUT_DIM) and out8.dtype == jnp.bfloat16
    out8_f = out8.astype(jnp.float32)
    assert bool(jnp.all(jnp.isfinite(out8_f)))
    mirror8 = ref_mirror(x8).astype(jnp.bfloat16).astype(jnp.float32)
    assert jnp.allclose(out8_f, mirror8, atol=3e-2, rtol=3e-2)
    assert jnp.allclose(out8_f, ref_f32(x8), atol=1e-1, rtol=1e-1)

    # --- module-exact output dtype (f32) ---
    out8_32 = jax.block_until_ready(
        toy_model_forward(x8, w1k, b1k, w2k, b2k, out_dtype=jnp.float32))
    assert out8_32.shape == (8, OUT_DIM) and out8_32.dtype == jnp.float32
    assert jnp.allclose(out8_32, ref_mirror(x8), atol=2e-2, rtol=2e-2)

    # --- ragged batch: exercises partial edge blocks + a 2-step grid, no pad/slice ---
    x40 = jax.random.normal(k_x, (40, IN_DIM), dtype=jnp.float32)
    out40 = jax.block_until_ready(toy_model_forward(x40, w1k, b1k, w2k, b2k))
    assert out40.shape == (40, OUT_DIM)
    out40_f = out40.astype(jnp.float32)
    assert bool(jnp.all(jnp.isfinite(out40_f)))
    assert jnp.allclose(out40_f, ref_f32(x40), atol=1e-1, rtol=1e-1)

    print("KERNEL_OK")
</pallas_src>

<mosaic_0001>
module attributes {stable_mosaic.version = 11 : i64} {
  func.func @toy_mlp_kernel(%arg0: i32, %arg1: memref<16x256xf32, #tpu.memory_space<vmem>>, %arg2: memref<256x512xbf16, #tpu.memory_space<vmem>>, %arg3: memref<1x512xf32, #tpu.memory_space<vmem>>, %arg4: memref<512x512xbf16, #tpu.memory_space<vmem>>, %arg5: memref<1x512xf32, #tpu.memory_space<vmem>>, %arg6: memref<16x512xbf16, #tpu.memory_space<vmem>>) attributes {dimension_semantics = [#tpu.dimension_semantics<parallel>], iteration_bounds = array<i64: 1>, scalar_prefetch = 0 : i64, scratch_operands = 0 : i64, tpu.core_type = #tpu.core_type<tc>, window_params = [{transform_indices = @transform_0, window_bounds = array<i64: 16, 256>}, {pipeline_mode = #tpu.pipeline_mode<synchronous>, transform_indices = @transform_1, window_bounds = array<i64: 256, 512>}, {pipeline_mode = #tpu.pipeline_mode<synchronous>, transform_indices = @transform_2, window_bounds = array<i64: 1, 512>}, {pipeline_mode = #tpu.pipeline_mode<synchronous>, transform_indices = @transform_3, window_bounds = array<i64: 512, 512>}, {pipeline_mode = #tpu.pipeline_mode<synchronous>, transform_indices = @transform_4, window_bounds = array<i64: 1, 512>}, {transform_indices = @transform_5, window_bounds = array<i64: 16, 512>}]} {
    %c0 = arith.constant 0 : index
    %c0_0 = arith.constant 0 : index
    %0 = vector.load %arg1[%c0, %c0_0] : memref<16x256xf32, #tpu.memory_space<vmem>>, vector<16x256xf32>
    %1 = arith.truncf %0 : vector<16x256xf32> to vector<16x256xbf16>
    %c0_1 = arith.constant 0 : index
    %c0_2 = arith.constant 0 : index
    %2 = vector.load %arg2[%c0_1, %c0_2] : memref<256x512xbf16, #tpu.memory_space<vmem>>, vector<256x512xbf16>
    %cst = arith.constant dense<0.000000e+00> : vector<16x512xf32>
    %3 = tpu.matmul %1, %2, %cst {dimension_numbers = #tpu.dot_dimension_numbers<[1], [0], [0], [1], [0, 0, 1, 1], [], []>} : vector<16x256xbf16>, vector<256x512xbf16>, vector<16x512xf32> -> vector<16x512xf32>
    %c0_3 = arith.constant 0 : index
    %c0_4 = arith.constant 0 : index
    %4 = vector.load %arg3[%c0_3, %c0_4] : memref<1x512xf32, #tpu.memory_space<vmem>>, vector<1x512xf32>
    %5 = vector.broadcast %4 : vector<1x512xf32> to vector<16x512xf32>
    %6 = arith.addf %3, %5 : vector<16x512xf32>
    %cst_5 = arith.constant 0.000000e+00 : f32
    %7 = vector.broadcast %cst_5 : f32 to vector<16x512xf32>
    %8 = arith.maximumf %6, %7 : vector<16x512xf32>
    %9 = arith.truncf %8 : vector<16x512xf32> to vector<16x512xbf16>
    %c0_6 = arith.constant 0 : index
    %c0_7 = arith.constant 0 : index
    %10 = vector.load %arg4[%c0_6, %c0_7] : memref<512x512xbf16, #tpu.memory_space<vmem>>, vector<512x512xbf16>
    %cst_8 = arith.constant dense<0.000000e+00> : vector<16x512xf32>
    %11 = tpu.matmul %9, %10, %cst_8 {dimension_numbers = #tpu.dot_dimension_numbers<[1], [0], [0], [1], [0, 0, 1, 1], [], []>} : vector<16x512xbf16>, vector<512x512xbf16>, vector<16x512xf32> -> vector<16x512xf32>
    %c0_9 = arith.constant 0 : index
    %c0_10 = arith.constant 0 : index
    %12 = vector.load %arg5[%c0_9, %c0_10] : memref<1x512xf32, #tpu.memory_space<vmem>>, vector<1x512xf32>
    %13 = vector.broadcast %12 : vector<1x512xf32> to vector<16x512xf32>
    %14 = arith.addf %11, %13 : vector<16x512xf32>
    %15 = arith.truncf %14 : vector<16x512xf32> to vector<16x512xbf16>
    %c0_11 = arith.constant 0 : index
    %c0_12 = arith.constant 0 : index
    %16 = vector.load %arg6[%c0_11, %c0_12] : memref<16x512xbf16, #tpu.memory_space<vmem>>, vector<16x512xbf16>
    tpu.vector_store %arg6[%c0_11, %c0_12], %15 {strides = array<i32>} : memref<16x512xbf16, #tpu.memory_space<vmem>>, vector<16x512xbf16>,
    return
  }
  func.func @transform_0(%arg0: i32) -> (i32, i32) {
    %c0_i32 = arith.constant 0 : i32
    %c0_i32_0 = arith.constant 0 : i32
    return %arg0, %c0_i32 : i32, i32
  }
  func.func @transform_1(%arg0: i32) -> (i32, i32) {
    %c0_i32 = arith.constant 0 : i32
    %c0_i32_0 = arith.constant 0 : i32
    %c0_i32_1 = arith.constant 0 : i32
    return %c0_i32, %c0_i32_0 : i32, i32
  }
  func.func @transform_2(%arg0: i32) -> (i32, i32) {
    %c0_i32 = arith.constant 0 : i32
    %c0_i32_0 = arith.constant 0 : i32
    %c0_i32_1 = arith.constant 0 : i32
    return %c0_i32, %c0_i32_0 : i32, i32
  }
  func.func @transform_3(%arg0: i32) -> (i32, i32) {
    %c0_i32 = arith.constant 0 : i32
    %c0_i32_0 = arith.constant 0 : i32
    %c0_i32_1 = arith.constant 0 : i32
    return %c0_i32, %c0_i32_0 : i32, i32
  }
  func.func @transform_4(%arg0: i32) -> (i32, i32) {
    %c0_i32 = arith.constant 0 : i32
    %c0_i32_0 = arith.constant 0 : i32
    %c0_i32_1 = arith.constant 0 : i32
    return %c0_i32, %c0_i32_0 : i32, i32
  }
  func.func @transform_5(%arg0: i32) -> (i32, i32) {
    %c0_i32 = arith.constant 0 : i32
    %c0_i32_0 = arith.constant 0 : i32
    return %arg0, %c0_i32 : i32, i32
  }
}

</mosaic_0001>

<llo_original>
// kernel: toy_model_forward.1
$region0: #{toy_model_forward.1}
  #allocation0 [shape = 'u32[]', space=smem, size = 0x4, offset = 0x4, fixed_abs, tag = 'smem constant byte address 0x4 - core index']
  #allocation1 [shape = 'u32[72,128]{1,0:T(1,128)}', space=vmem, size = 0x9000, scoped, tag = 'internal scratch']
  %s0 = inlined_call_operand.hbm [shape: f32[8,256], index: 0, kind: input, shape index: {}]
  %s1 = inlined_call_operand.hbm [shape: bf16[256,512], index: 1, kind: input, shape index: {}]
  %s2 = inlined_call_operand.hbm [shape: f32[1,512], index: 2, kind: input, shape index: {}]
  %s3 = inlined_call_operand.hbm [shape: bf16[512,512], index: 3, kind: input, shape index: {}]
  %s4 = inlined_call_operand.hbm [shape: f32[1,512], index: 4, kind: input, shape index: {}]
  %s5 = inlined_call_operand.hbm [shape: bf16[8,512], index: 5, kind: output, shape index: {}]
  %s6 = sld [smem:[#allocation0]]
  $region50: #{toy_model_forward.1} parent=0
    _
  %s8 = ssub.s32 1, %s6
  %s9 = scalar_select 0, %s8, %s6
  $region1: #{toy_model_forward.1} parent=0
    #allocation2 [shape = 'u8[16384]{0}', space=vmem, size = 0x4000, scoped, tag = 'input window, operand 0, single buffered']
    #allocation3 [shape = 's32[1]{0}', space=sflag, size = 0x4, scoped, tag = 'scoped memory for toy_model_forward.1']
    #allocation4 [shape = 's32[1]{0}', space=sflag, size = 0x4, scoped, tag = 'scoped memory for toy_model_forward.1']
    #allocation5 [shape = 'u8[262144]{0}', space=vmem, size = 0x40000, scoped, tag = 'input window, operand 1, single buffered']
    #allocation6 [shape = 's32[1]{0}', space=sflag, size = 0x4, scoped, tag = 'scoped memory for toy_model_forward.1']
    #allocation7 [shape = 'u8[2048]{0}', space=vmem, size = 0x800, scoped, tag = 'input window, operand 2, single buffered']
    #allocation8 [shape = 'u8[524288]{0}', space=vmem, size = 0x80000, scoped, tag = 'input window, operand 3, single buffered']
    #allocation9 [shape = 's32[1]{0}', space=sflag, size = 0x4, scoped, tag = 'scoped memory for toy_model_forward.1']
    #allocation10 [shape = 'u8[2048]{0}', space=vmem, size = 0x800, scoped, tag = 'input window, operand 4, single buffered']
    #allocation11 [shape = 'u8[16384]{0}', space=vmem, size = 0x4000, scoped, tag = 'output window, operand 0, single buffered']
    %10 = vsyncpa [#allocation3], 0
    %11 = vsyncpa [#allocation6], 0
    %12 = vsyncpa [#allocation9], 0
    %13 = vsyncpa [#allocation4], 0
    // Predicated region
    $region2: #{toy_model_forward.1} parent=1 // pred_check
      _
    $region3: #{toy_model_forward.1} parent=1 // pred_check_branch
      %15 = sbr.rel (0) target = $region5
    $region4: #{toy_model_forward.1} parent=1 // pred_region
      %17 = vsyncadd [#allocation3], 256
      %s18 = sshll.u32 %s0, 4
      %s19 = int_to_ptr.hbm [resolvable:$true] %s18
      %s20 = sshll.u32 [#allocation2], 4
      %s21 = int_to_ptr.vmem [resolvable:$true] %s20
      %26 = dma.hbm_to_vmem [thread:$0]  %s19, 256, %s21, [#allocation3], 256, 256, 16
    $region5: #{toy_model_forward.1} parent=1 // pred_fallthru
      _
    // Predicated region
    $region6: #{toy_model_forward.1} parent=1 // pred_check
      _
    $region7: #{toy_model_forward.1} parent=1 // pred_check_branch
      %28 = sbr.rel (0) target = $region9
    $region8: #{toy_model_forward.1} parent=1 // pred_region
      %30 = vsyncadd [#allocation6], 0
      %s31 = sshll.u32 %s1, 4
      %s32 = int_to_ptr.hbm [resolvable:$true] %s31
      %s33 = sshll.u32 [#allocation5], 4
      %s34 = int_to_ptr.vmem [resolvable:$true] %s33
      %39 = dma.hbm_to_vmem [thread:$0]  %s32, 8192, %s34, [#allocation6], 256, 256, 16
    $region9: #{toy_model_forward.1} parent=1 // pred_fallthru
      _
    // Predicated region
    $region10: #{toy_model_forward.1} parent=1 // pred_check
      _
    $region11: #{toy_model_forward.1} parent=1 // pred_check_branch
      %41 = sbr.rel (0) target = $region13
    $region12: #{toy_model_forward.1} parent=1 // pred_region
      %43 = vsyncadd [#allocation6], 0
      %s45 = sshll.u32 %s2, 4
      %s46 = int_to_ptr.hbm [resolvable:$true] %s45
      %s47 = sshll.u32 [#allocation7], 4
      %s48 = int_to_ptr.vmem [resolvable:$true] %s47
      %50 = dma.hbm_to_vmem [thread:$0]  %s46, 64, %s48, [#allocation6]
    $region13: #{toy_model_forward.1} parent=1 // pred_fallthru
      _
    // Predicated region
    $region14: #{toy_model_forward.1} parent=1 // pred_check
      _
    $region15: #{toy_model_forward.1} parent=1 // pred_check_branch
      %52 = sbr.rel (0) target = $region17
    $region16: #{toy_model_forward.1} parent=1 // pred_region
      %54 = vsyncadd [#allocation9], 0
      %s55 = sshll.u32 %s3, 4
      %s56 = int_to_ptr.hbm [resolvable:$true] %s55
      %s57 = sshll.u32 [#allocation8], 4
      %s58 = int_to_ptr.vmem [resolvable:$true] %s57
      %63 = dma.hbm_to_vmem [thread:$0]  %s56, 16384, %s58, [#allocation9], 256, 256, 16
    $region17: #{toy_model_forward.1} parent=1 // pred_fallthru
      _
    // Predicated region
    $region18: #{toy_model_forward.1} parent=1 // pred_check
      _
    $region19: #{toy_model_forward.1} parent=1 // pred_check_branch
      %65 = sbr.rel (0) target = $region21
    $region20: #{toy_model_forward.1} parent=1 // pred_region
      %67 = vsyncadd [#allocation9], 0
      %s69 = sshll.u32 %s4, 4
      %s70 = int_to_ptr.hbm [resolvable:$true] %s69
      %s71 = sshll.u32 [#allocation10], 4
      %s72 = int_to_ptr.vmem [resolvable:$true] %s71
      %74 = dma.hbm_to_vmem [thread:$0]  %s70, 64, %s72, [#allocation9]
    $region21: #{toy_model_forward.1} parent=1 // pred_fallthru
      _
    // Predicated region
    $region22: #{toy_model_forward.1} parent=1 // pred_check
      _
    $region23: #{toy_model_forward.1} parent=1 // pred_check_branch
      %76 = sbr.rel (0) target = $region25
    $region24: #{toy_model_forward.1} parent=1 // pred_region
      %78 = dma.done [#allocation3], 512
    $region25: #{toy_model_forward.1} parent=1 // pred_fallthru
      _
    // Predicated region
    $region26: #{toy_model_forward.1} parent=1 // pred_check
      _
    $region27: #{toy_model_forward.1} parent=1 // pred_check_branch
      %80 = sbr.rel (0) target = $region29
    $region28: #{toy_model_forward.1} parent=1 // pred_region
      %82 = dma.done [#allocation6], 8192
    $region29: #{toy_model_forward.1} parent=1 // pred_fallthru
      _
    // Predicated region
    $region30: #{toy_model_forward.1} parent=1 // pred_check
      _
    $region31: #{toy_model_forward.1} parent=1 // pred_check_branch
      %84 = sbr.rel (0) target = $region33
    $region32: #{toy_model_forward.1} parent=1 // pred_region
      %86 = dma.done [#allocation6], 64
    $region33: #{toy_model_forward.1} parent=1 // pred_fallthru
      _
    // Predicated region
    $region34: #{toy_model_forward.1} parent=1 // pred_check
      _
    $region35: #{toy_model_forward.1} parent=1 // pred_check_branch
      %88 = sbr.rel (0) target = $region37
    $region36: #{toy_model_forward.1} parent=1 // pred_region
      %90 = dma.done [#allocation9], 16384
    $region37: #{toy_model_forward.1} parent=1 // pred_fallthru
      _
    // Predicated region
    $region38: #{toy_model_forward.1} parent=1 // pred_check
      _
    $region39: #{toy_model_forward.1} parent=1 // pred_check_branch
      %92 = sbr.rel (0) target = $region41
    $region40: #{toy_model_forward.1} parent=1 // pred_region
      %94 = dma.done [#allocation9], 64
    $region41: #{toy_model_forward.1} parent=1 // pred_fallthru
      _
    %v95 = vld [vmem:[#allocation2] sm:$0xff]
    %v96 = vld [vmem:[#allocation2 + $0x8] sm:$0xff]
    %v97 = vld [vmem:[#allocation2 + $0x10] sm:$0xff]
    %v98 = vld [vmem:[#allocation2 + $0x18] sm:$0xff]
    %v99 = vpack.c.bf16 %v97, %v95
    %v100 = vpack.c.bf16 %v98, %v96
    %v101 = vld [vmem:[#allocation5] sm:$0xff]
    %v102 = vld [vmem:[#allocation5 + $0x8] sm:$0xff]
    %v103 = vld [vmem:[#allocation5 + $0x10] sm:$0xff]
    %v104 = vld [vmem:[#allocation5 + $0x18] sm:$0xff]
    %v105 = vld [vmem:[#allocation5 + $0x20] sm:$0xff]
    %v106 = vld [vmem:[#allocation5 + $0x28] sm:$0xff]
    %v107 = vld [vmem:[#allocation5 + $0x30] sm:$0xff]
    %v108 = vld [vmem:[#allocation5 + $0x38] sm:$0xff]
    %v109 = vld [vmem:[#allocation5 + $0x40] sm:$0xff]
    %v110 = vld [vmem:[#allocation5 + $0x48] sm:$0xff]
    %v111 = vld [vmem:[#allocation5 + $0x50] sm:$0xff]
    %v112 = vld [vmem:[#allocation5 + $0x58] sm:$0xff]
    %v113 = vld [vmem:[#allocation5 + $0x60] sm:$0xff]
    %v114 = vld [vmem:[#allocation5 + $0x68] sm:$0xff]
    %v115 = vld [vmem:[#allocation5 + $0x70] sm:$0xff]
    %v116 = vld [vmem:[#allocation5 + $0x78] sm:$0xff]
    %v117 = vld [vmem:[#allocation5 + $0x80] sm:$0xff]
    %v118 = vld [vmem:[#allocation5 + $0x88] sm:$0xff]
    %v119 = vld [vmem:[#allocation5 + $0x90] sm:$0xff]
    %v120 = vld [vmem:[#allocation5 + $0x98] sm:$0xff]
    %v121 = vld [vmem:[#allocation5 + $0xa0] sm:$0xff]
    %v122 = vld [vmem:[#allocation5 + $0xa8] sm:$0xff]
    %v123 = vld [vmem:[#allocation5 + $0xb0] sm:$0xff]
    %v124 = vld [vmem:[#allocation5 + $0xb8] sm:$0xff]
    %v125 = vld [vmem:[#allocation5 + $0xc0] sm:$0xff]
    %v126 = vld [vmem:[#allocation5 + $0xc8] sm:$0xff]
    %v127 = vld [vmem:[#allocation5 + $0xd0] sm:$0xff]
    %v128 = vld [vmem:[#allocation5 + $0xd8] sm:$0xff]
    %v129 = vld [vmem:[#allocation5 + $0xe0] sm:$0xff]
    %v130 = vld [vmem:[#allocation5 + $0xe8] sm:$0xff]
    %v131 = vld [vmem:[#allocation5 + $0xf0] sm:$0xff]
    %v132 = vld [vmem:[#allocation5 + $0xf8] sm:$0xff]
    %v133 = vld [vmem:[#allocation5 + $0x100] sm:$0xff]
    %v134 = vld [vmem:[#allocation5 + $0x108] sm:$0xff]
    %v135 = vld [vmem:[#allocation5 + $0x110] sm:$0xff]
    %v136 = vld [vmem:[#allocation5 + $0x118] sm:$0xff]
    %v137 = vld [vmem:[#allocation5 + $0x120] sm:$0xff]
    %v138 = vld [vmem:[#allocation5 + $0x128] sm:$0xff]
    %v139 = vld [vmem:[#allocation5 + $0x130] sm:$0xff]
    %v140 = vld [vmem:[#allocation5 + $0x138] sm:$0xff]
    %v141 = vld [vmem:[#allocation5 + $0x140] sm:$0xff]
    %v142 = vld [vmem:[#allocation5 + $0x148] sm:$0xff]
    %v143 = vld [vmem:[#allocation5 + $0x150] sm:$0xff]
    %v144 = vld [vmem:[#allocation5 + $0x158] sm:$0xff]
    %v145 = vld [vmem:[#allocation5 + $0x160] sm:$0xff]
    %v146 = vld [vmem:[#allocation5 + $0x168] sm:$0xff]
    %v147 = vld [vmem:[#allocation5 + $0x170] sm:$0xff]
    %v148 = vld [vmem:[#allocation5 + $0x178] sm:$0xff]
    %v149 = vld [vmem:[#allocation5 + $0x180] sm:$0xff]
    %v150 = vld [vmem:[#allocation5 + $0x188] sm:$0xff]
    %v151 = vld [vmem:[#allocation5 + $0x190] sm:$0xff]
    %v152 = vld [vmem:[#allocation5 + $0x198] sm:$0xff]
    %v153 = vld [vmem:[#allocation5 + $0x1a0] sm:$0xff]
    %v154 = vld [vmem:[#allocation5 + $0x1a8] sm:$0xff]
    %v155 = vld [vmem:[#allocation5 + $0x1b0] sm:$0xff]
    %v156 = vld [vmem:[#allocation5 + $0x1b8] sm:$0xff]
    %v157 = vld [vmem:[#allocation5 + $0x1c0] sm:$0xff]
    %v158 = vld [vmem:[#allocation5 + $0x1c8] sm:$0xff]
    %v159 = vld [vmem:[#allocation5 + $0x1d0] sm:$0xff]
    %v160 = vld [vmem:[#allocation5 + $0x1d8] sm:$0xff]
    %v161 = vld [vmem:[#allocation5 + $0x1e0] sm:$0xff]
    %v162 = vld [vmem:[#allocation5 + $0x1e8] sm:$0xff]
    %v163 = vld [vmem:[#allocation5 + $0x1f0] sm:$0xff]
    %v164 = vld [vmem:[#allocation5 + $0x1f8] sm:$0xff]
    %v165 = vld [vmem:[#allocation7] sm:$0xf]
    %v167 = vperm.slane %v165, 0
    %v168 = vperm.slane %v165, 1
    %v169 = vperm.slane %v165, 2
    %v170 = vperm.slane %v165, 3
    %v239 = vunpack.c.l.b16 %v101
    %v240 = vunpack.c.h.b16 %v101
    %v241 = vunpack.c.l.b16 %v102
    %v242 = vunpack.c.h.b16 %v102
    %v243 = vunpack.c.l.b16 %v103
    %v244 = vunpack.c.h.b16 %v103
    %v245 = vunpack.c.l.b16 %v104
    %v246 = vunpack.c.h.b16 %v104
    %v247 = vunpack.c.l.b16 %v105
    %v248 = vunpack.c.h.b16 %v105
    %v249 = vunpack.c.l.b16 %v106
    %v250 = vunpack.c.h.b16 %v106
    %v251 = vunpack.c.l.b16 %v107
    %v252 = vunpack.c.h.b16 %v107
    %v253 = vunpack.c.l.b16 %v108
    %v254 = vunpack.c.h.b16 %v108
    %v255 = vunpack.c.l.b16 %v109
    %v256 = vunpack.c.h.b16 %v109
    %v257 = vunpack.c.l.b16 %v110
    %v258 = vunpack.c.h.b16 %v110
    %v259 = vunpack.c.l.b16 %v111
    %v260 = vunpack.c.h.b16 %v111
    %v261 = vunpack.c.l.b16 %v112
    %v262 = vunpack.c.h.b16 %v112
    %v263 = vunpack.c.l.b16 %v113
    %v264 = vunpack.c.h.b16 %v113
    %v265 = vunpack.c.l.b16 %v114
    %v266 = vunpack.c.h.b16 %v114
    %v267 = vunpack.c.l.b16 %v115
    %v268 = vunpack.c.h.b16 %v115
    %v269 = vunpack.c.l.b16 %v116
    %v270 = vunpack.c.h.b16 %v116
    %v271 = vunpack.c.l.b16 %v117
    %v272 = vunpack.c.h.b16 %v117
    %v273 = vunpack.c.l.b16 %v118
    %v274 = vunpack.c.h.b16 %v118
    %v275 = vunpack.c.l.b16 %v119
    %v276 = vunpack.c.h.b16 %v119
    %v277 = vunpack.c.l.b16 %v120
    %v278 = vunpack.c.h.b16 %v120
    %v279 = vunpack.c.l.b16 %v121
    %v280 = vunpack.c.h.b16 %v121
    %v281 = vunpack.c.l.b16 %v122
    %v282 = vunpack.c.h.b16 %v122
    %v283 = vunpack.c.l.b16 %v123
    %v284 = vunpack.c.h.b16 %v123
    %v285 = vunpack.c.l.b16 %v124
    %v286 = vunpack.c.h.b16 %v124
    %v287 = vunpack.c.l.b16 %v125
    %v288 = vunpack.c.h.b16 %v125
    %v289 = vunpack.c.l.b16 %v126
    %v290 = vunpack.c.h.b16 %v126
    %v291 = vunpack.c.l.b16 %v127
    %v292 = vunpack.c.h.b16 %v127
    %v293 = vunpack.c.l.b16 %v128
    %v294 = vunpack.c.h.b16 %v128
    %v295 = vunpack.c.l.b16 %v129
    %v296 = vunpack.c.h.b16 %v129
    %v297 = vunpack.c.l.b16 %v130
    %v298 = vunpack.c.h.b16 %v130
    %v299 = vunpack.c.l.b16 %v131
    %v300 = vunpack.c.h.b16 %v131
    %v301 = vunpack.c.l.b16 %v132
    %v302 = vunpack.c.h.b16 %v132
    %v303 = vunpack.c.l.b16 %v133
    %v304 = vunpack.c.h.b16 %v133
    %v305 = vunpack.c.l.b16 %v134
    %v306 = vunpack.c.h.b16 %v134
    %v307 = vunpack.c.l.b16 %v135
    %v308 = vunpack.c.h.b16 %v135
    %v309 = vunpack.c.l.b16 %v136
    %v310 = vunpack.c.h.b16 %v136
    %v311 = vunpack.c.l.b16 %v137
    %v312 = vunpack.c.h.b16 %v137
    %v313 = vunpack.c.l.b16 %v138
    %v314 = vunpack.c.h.b16 %v138
    %v315 = vunpack.c.l.b16 %v139
    %v316 = vunpack.c.h.b16 %v139
    %v317 = vunpack.c.l.b16 %v140
    %v318 = vunpack.c.h.b16 %v140
    %v319 = vunpack.c.l.b16 %v141
    %v320 = vunpack.c.h.b16 %v141
    %v321 = vunpack.c.l.b16 %v142
    %v322 = vunpack.c.h.b16 %v142
    %v323 = vunpack.c.l.b16 %v143
    %v324 = vunpack.c.h.b16 %v143
    %v325 = vunpack.c.l.b16 %v144
    %v326 = vunpack.c.h.b16 %v144
    %v327 = vunpack.c.l.b16 %v145
    %v328 = vunpack.c.h.b16 %v145
    %v329 = vunpack.c.l.b16 %v146
    %v330 = vunpack.c.h.b16 %v146
    %v331 = vunpack.c.l.b16 %v147
    %v332 = vunpack.c.h.b16 %v147
    %v333 = vunpack.c.l.b16 %v148
    %v334 = vunpack.c.h.b16 %v148
    %v335 = vunpack.c.l.b16 %v149
    %v336 = vunpack.c.h.b16 %v149
    %v337 = vunpack.c.l.b16 %v150
    %v338 = vunpack.c.h.b16 %v150
    %v339 = vunpack.c.l.b16 %v151
    %v340 = vunpack.c.h.b16 %v151
    %v341 = vunpack.c.l.b16 %v152
    %v342 = vunpack.c.h.b16 %v152
    %v343 = vunpack.c.l.b16 %v153
    %v344 = vunpack.c.h.b16 %v153
    %v345 = vunpack.c.l.b16 %v154
    %v346 = vunpack.c.h.b16 %v154
    %v347 = vunpack.c.l.b16 %v155
    %v348 = vunpack.c.h.b16 %v155
    %v349 = vunpack.c.l.b16 %v156
    %v350 = vunpack.c.h.b16 %v156
    %v351 = vunpack.c.l.b16 %v157
    %v352 = vunpack.c.h.b16 %v157
    %v353 = vunpack.c.l.b16 %v158
    %v354 = vunpack.c.h.b16 %v158
    %v355 = vunpack.c.l.b16 %v159
    %v356 = vunpack.c.h.b16 %v159
    %v357 = vunpack.c.l.b16 %v160
    %v358 = vunpack.c.h.b16 %v160
    %v359 = vunpack.c.l.b16 %v161
    %v360 = vunpack.c.h.b16 %v161
    %v361 = vunpack.c.l.b16 %v162
    %v362 = vunpack.c.h.b16 %v162
    %v363 = vunpack.c.l.b16 %v163
    %v364 = vunpack.c.h.b16 %v163
    %v365 = vunpack.c.l.b16 %v164
    %v366 = vunpack.c.h.b16 %v164
    %v367 = vpack.c.b16 %v243, %v239
    %v368 = vpack.c.b16 %v244, %v240
    %v369 = vpack.c.b16 %v245, %v241
    %v370 = vpack.c.b16 %v246, %v242
    %v371 = vpack.c.b16 %v251, %v247
    %v372 = vpack.c.b16 %v252, %v248
    %v373 = vpack.c.b16 %v253, %v249
    %v374 = vpack.c.b16 %v254, %v250
    %v375 = vpack.c.b16 %v259, %v255
    %v376 = vpack.c.b16 %v260, %v256
    %v377 = vpack.c.b16 %v261, %v257
    %v378 = vpack.c.b16 %v262, %v258
    %v379 = vpack.c.b16 %v267, %v263
    %v380 = vpack.c.b16 %v268, %v264
    %v381 = vpack.c.b16 %v269, %v265
    %v382 = vpack.c.b16 %v270, %v266
    %v383 = vpack.c.b16 %v275, %v271
    %v384 = vpack.c.b16 %v276, %v272
    %v385 = vpack.c.b16 %v277, %v273
    %v386 = vpack.c.b16 %v278, %v274
    %v387 = vpack.c.b16 %v283, %v279
    %v388 = vpack.c.b16 %v284, %v280
    %v389 = vpack.c.b16 %v285, %v281
    %v390 = vpack.c.b16 %v286, %v282
    %v391 = vpack.c.b16 %v291, %v287
    %v392 = vpack.c.b16 %v292, %v288
    %v393 = vpack.c.b16 %v293, %v289
    %v394 = vpack.c.b16 %v294, %v290
    %v395 = vpack.c.b16 %v299, %v295
    %v396 = vpack.c.b16 %v300, %v296
    %v397 = vpack.c.b16 %v301, %v297
    %v398 = vpack.c.b16 %v302, %v298
    %v399 = vpack.c.b16 %v307, %v303
    %v400 = vpack.c.b16 %v308, %v304
    %v401 = vpack.c.b16 %v309, %v305
    %v402 = vpack.c.b16 %v310, %v306
    %v403 = vpack.c.b16 %v315, %v311
    %v404 = vpack.c.b16 %v316, %v312
    %v405 = vpack.c.b16 %v317, %v313
    %v406 = vpack.c.b16 %v318, %v314
    %v407 = vpack.c.b16 %v323, %v319
    %v408 = vpack.c.b16 %v324, %v320
    %v409 = vpack.c.b16 %v325, %v321
    %v410 = vpack.c.b16 %v326, %v322
    %v411 = vpack.c.b16 %v331, %v327
    %v412 = vpack.c.b16 %v332, %v328
    %v413 = vpack.c.b16 %v333, %v329
    %v414 = vpack.c.b16 %v334, %v330
    %v415 = vpack.c.b16 %v339, %v335
    %v416 = vpack.c.b16 %v340, %v336
    %v417 = vpack.c.b16 %v341, %v337
    %v418 = vpack.c.b16 %v342, %v338
    %v419 = vpack.c.b16 %v347, %v343
    %v420 = vpack.c.b16 %v348, %v344
    %v421 = vpack.c.b16 %v349, %v345
    %v422 = vpack.c.b16 %v350, %v346
    %v423 = vpack.c.b16 %v355, %v351
    %v424 = vpack.c.b16 %v356, %v352
    %v425 = vpack.c.b16 %v357, %v353
    %v426 = vpack.c.b16 %v358, %v354
    %v427 = vpack.c.b16 %v363, %v359
    %v428 = vpack.c.b16 %v364, %v360
    %v429 = vpack.c.b16 %v365, %v361
    %v430 = vpack.c.b16 %v366, %v362
    %495 = vmatpush.bf16.msra.mxu0 %v395
    %496 = vmatpush.bf16.msra.mxu0 %v391
    %497 = vmatpush.bf16.msra.mxu0 %v387
    %498 = vmatpush.bf16.msra.mxu0 %v383
    %499 = vmatpush.bf16.msra.mxu0 %v379
    %500 = vmatpush.bf16.msra.mxu0 %v375
    %501 = vmatpush.bf16.msra.mxu0 %v371
    %502 = vmatpush.bf16.msra.mxu0 %v367
    %503 = vmatmul.bf16.gmra.mxu0 %v99
    %v504 = vpop.f32.mrf.mxu0
    %v505 = vadd.f32 %v167, %v504
    %v506 = vpop.f32.mrf.mxu0
    %v507 = vadd.f32 %v167, %v506
    %508 = vdwg.mxu0
    %509 = vmatpush.bf16.msra.mxu0 %v427
    %510 = vmatpush.bf16.msra.mxu0 %v423
    %511 = vmatpush.bf16.msra.mxu0 %v419
    %512 = vmatpush.bf16.msra.mxu0 %v415
    %513 = vmatpush.bf16.msra.mxu0 %v411
    %514 = vmatpush.bf16.msra.mxu0 %v407
    %515 = vmatpush.bf16.msra.mxu0 %v403
    %516 = vmatpush.bf16.msra.mxu0 %v399
    %517 = vmatmul.bf16.gmra.mxu0 %v100
    %v518 = vpop.f32.mrf.mxu0
    %v519 = vadd.f32 %v505, %v518
    %v520 = vpop.f32.mrf.mxu0
    %v521 = vadd.f32 %v507, %v520
    %522 = vdwg.mxu0
    %523 = vmatpush.bf16.msra.mxu0 %v396
    %524 = vmatpush.bf16.msra.mxu0 %v392
    %525 = vmatpush.bf16.msra.mxu0 %v388
    %526 = vmatpush.bf16.msra.mxu0 %v384
    %527 = vmatpush.bf16.msra.mxu0 %v380
    %528 = vmatpush.bf16.msra.mxu0 %v376
    %529 = vmatpush.bf16.msra.mxu0 %v372
    %530 = vmatpush.bf16.msra.mxu0 %v368
    %531 = vmatmul.bf16.gmra.mxu0 %v99
    %v532 = vpop.f32.mrf.mxu0
    %v533 = vadd.f32 %v168, %v532
    %v534 = vpop.f32.mrf.mxu0
    %v535 = vadd.f32 %v168, %v534
    %536 = vdwg.mxu0
    %537 = vmatpush.bf16.msra.mxu0 %v428
    %538 = vmatpush.bf16.msra.mxu0 %v424
    %539 = vmatpush.bf16.msra.mxu0 %v420
    %540 = vmatpush.bf16.msra.mxu0 %v416
    %541 = vmatpush.bf16.msra.mxu0 %v412
    %542 = vmatpush.bf16.msra.mxu0 %v408
    %543 = vmatpush.bf16.msra.mxu0 %v404
    %544 = vmatpush.bf16.msra.mxu0 %v400
    %545 = vmatmul.bf16.gmra.mxu0 %v100
    %v546 = vpop.f32.mrf.mxu0
    %v547 = vadd.f32 %v533, %v546
    %v548 = vpop.f32.mrf.mxu0
    %v549 = vadd.f32 %v535, %v548
    %550 = vdwg.mxu0
    %551 = vmatpush.bf16.msra.mxu0 %v397
    %552 = vmatpush.bf16.msra.mxu0 %v393
    %553 = vmatpush.bf16.msra.mxu0 %v389
    %554 = vmatpush.bf16.msra.mxu0 %v385
    %555 = vmatpush.bf16.msra.mxu0 %v381
    %556 = vmatpush.bf16.msra.mxu0 %v377
    %557 = vmatpush.bf16.msra.mxu0 %v373
    %558 = vmatpush.bf16.msra.mxu0 %v369
    %559 = vmatmul.bf16.gmra.mxu0 %v99
    %v560 = vpop.f32.mrf.mxu0
    %v561 = vadd.f32 %v169, %v560
    %v562 = vpop.f32.mrf.mxu0
    %v563 = vadd.f32 %v169, %v562
    %564 = vdwg.mxu0
    %565 = vmatpush.bf16.msra.mxu0 %v429
    %566 = vmatpush.bf16.msra.mxu0 %v425
    %567 = vmatpush.bf16.msra.mxu0 %v421
    %568 = vmatpush.bf16.msra.mxu0 %v417
    %569 = vmatpush.bf16.msra.mxu0 %v413
    %570 = vmatpush.bf16.msra.mxu0 %v409
    %571 = vmatpush.bf16.msra.mxu0 %v405
    %572 = vmatpush.bf16.msra.mxu0 %v401
    %573 = vmatmul.bf16.gmra.mxu0 %v100
    %v574 = vpop.f32.mrf.mxu0
    %v575 = vadd.f32 %v561, %v574
    %v576 = vpop.f32.mrf.mxu0
    %v577 = vadd.f32 %v563, %v576
    %578 = vdwg.mxu0
    %579 = vmatpush.bf16.msra.mxu0 %v398
    %580 = vmatpush.bf16.msra.mxu0 %v394
    %581 = vmatpush.bf16.msra.mxu0 %v390
    %582 = vmatpush.bf16.msra.mxu0 %v386
    %583 = vmatpush.bf16.msra.mxu0 %v382
    %584 = vmatpush.bf16.msra.mxu0 %v378
    %585 = vmatpush.bf16.msra.mxu0 %v374
    %586 = vmatpush.bf16.msra.mxu0 %v370
    %587 = vmatmul.bf16.gmra.mxu0 %v99
    %v588 = vpop.f32.mrf.mxu0
    %v589 = vadd.f32 %v170, %v588
    %v590 = vpop.f32.mrf.mxu0
    %v591 = vadd.f32 %v170, %v590
    %592 = vdwg.mxu0
    %593 = vmatpush.bf16.msra.mxu0 %v430
    %594 = vmatpush.bf16.msra.mxu0 %v426
    %595 = vmatpush.bf16.msra.mxu0 %v422
    %596 = vmatpush.bf16.msra.mxu0 %v418
    %597 = vmatpush.bf16.msra.mxu0 %v414
    %598 = vmatpush.bf16.msra.mxu0 %v410
    %599 = vmatpush.bf16.msra.mxu0 %v406
    %600 = vmatpush.bf16.msra.mxu0 %v402
    %601 = vmatmul.bf16.gmra.mxu0 %v100
    %v602 = vpop.f32.mrf.mxu0
    %v603 = vadd.f32 %v589, %v602
    %v604 = vpop.f32.mrf.mxu0
    %v605 = vadd.f32 %v591, %v604
    %606 = vdwg.mxu0
    %v607 = vmax.f32 %v519, 0.0
    %v608 = vmax.f32 %v547, 0.0
    %v609 = vmax.f32 %v575, 0.0
    %v610 = vmax.f32 %v603, 0.0
    %v611 = vmax.f32 %v521, 0.0
    %v612 = vmax.f32 %v549, 0.0
    %v613 = vmax.f32 %v577, 0.0
    %v614 = vmax.f32 %v605, 0.0
    %v615 = vpack.c.bf16 %v611, %v607
    %v616 = vpack.c.bf16 %v612, %v608
    %v617 = vpack.c.bf16 %v613, %v609
    %v618 = vpack.c.bf16 %v614, %v610
    %v619 = vld [vmem:[#allocation8] sm:$0xff]
    %v620 = vld [vmem:[#allocation8 + $0x8] sm:$0xff]
    %v621 = vld [vmem:[#allocation8 + $0x10] sm:$0xff]
    %v622 = vld [vmem:[#allocation8 + $0x18] sm:$0xff]
    %v623 = vld [vmem:[#allocation8 + $0x20] sm:$0xff]
    %v624 = vld [vmem:[#allocation8 + $0x28] sm:$0xff]
    %v625 = vld [vmem:[#allocation8 + $0x30] sm:$0xff]
    %v626 = vld [vmem:[#allocation8 + $0x38] sm:$0xff]
    %v627 = vld [vmem:[#allocation8 + $0x40] sm:$0xff]
    %v628 = vld [vmem:[#allocation8 + $0x48] sm:$0xff]
    %v629 = vld [vmem:[#allocation8 + $0x50] sm:$0xff]
    %v630 = vld [vmem:[#allocation8 + $0x58] sm:$0xff]
    %v631 = vld [vmem:[#allocation8 + $0x60] sm:$0xff]
    %v632 = vld [vmem:[#allocation8 + $0x68] sm:$0xff]
    %v633 = vld [vmem:[#allocation8 + $0x70] sm:$0xff]
    %v634 = vld [vmem:[#allocation8 + $0x78] sm:$0xff]
    %v635 = vld [vmem:[#allocation8 + $0x80] sm:$0xff]
    %v636 = vld [vmem:[#allocation8 + $0x88] sm:$0xff]
    %v637 = vld [vmem:[#allocation8 + $0x90] sm:$0xff]
    %v638 = vld [vmem:[#allocation8 + $0x98] sm:$0xff]
    %v639 = vld [vmem:[#allocation8 + $0xa0] sm:$0xff]
    %v640 = vld [vmem:[#allocation8 + $0xa8] sm:$0xff]
    %v641 = vld [vmem:[#allocation8 + $0xb0] sm:$0xff]
    %v642 = vld [vmem:[#allocation8 + $0xb8] sm:$0xff]
    %v643 = vld [vmem:[#allocation8 + $0xc0] sm:$0xff]
    %v644 = vld [vmem:[#allocation8 + $0xc8] sm:$0xff]
    %v645 = vld [vmem:[#allocation8 + $0xd0] sm:$0xff]
    %v646 = vld [vmem:[#allocation8 + $0xd8] sm:$0xff]
    %v647 = vld [vmem:[#allocation8 + $0xe0] sm:$0xff]
    %v648 = vld [vmem:[#allocation8 + $0xe8] sm:$0xff]
    %v649 = vld [vmem:[#allocation8 + $0xf0] sm:$0xff]
    %v650 = vld [vmem:[#allocation8 + $0xf8] sm:$0xff]
    %v651 = vld [vmem:[#allocation8 + $0x100] sm:$0xff]
    %v652 = vld [vmem:[#allocation8 + $0x108] sm:$0xff]
    %v653 = vld [vmem:[#allocation8 + $0x110] sm:$0xff]
    %v654 = vld [vmem:[#allocation8 + $0x118] sm:$0xff]
    %v655 = vld [vmem:[#allocation8 + $0x120] sm:$0xff]
    %v656 = vld [vmem:[#allocation8 + $0x128] sm:$0xff]
    %v657 = vld [vmem:[#allocation8 + $0x130] sm:$0xff]
    %v658 = vld [vmem:[#allocation8 + $0x138] sm:$0xff]
    %v659 = vld [vmem:[#allocation8 + $0x140] sm:$0xff]
    %v660 = vld [vmem:[#allocation8 + $0x148] sm:$0xff]
    %v661 = vld [vmem:[#allocation8 + $0x150] sm:$0xff]
    %v662 = vld [vmem:[#allocation8 + $0x158] sm:$0xff]
    %v663 = vld [vmem:[#allocation8 + $0x160] sm:$0xff]
    %v664 = vld [vmem:[#allocation8 + $0x168] sm:$0xff]
    %v665 = vld [vmem:[#allocation8 + $0x170] sm:$0xff]
    %v666 = vld [vmem:[#allocation8 + $0x178] sm:$0xff]
    %v667 = vld [vmem:[#allocation8 + $0x180] sm:$0xff]
    %v668 = vld [vmem:[#allocation8 + $0x188] sm:$0xff]
    %v669 = vld [vmem:[#allocation8 + $0x190] sm:$0xff]
    %v670 = vld [vmem:[#allocation8 + $0x198] sm:$0xff]
    %v671 = vld [vmem:[#allocation8 + $0x1a0] sm:$0xff]
    %v672 = vld [vmem:[#allocation8 + $0x1a8] sm:$0xff]
    %v673 = vld [vmem:[#allocation8 + $0x1b0] sm:$0xff]
    %v674 = vld [vmem:[#allocation8 + $0x1b8] sm:$0xff]
    %v675 = vld [vmem:[#allocation8 + $0x1c0] sm:$0xff]
    %v676 = vld [vmem:[#allocation8 + $0x1c8] sm:$0xff]
    %v677 = vld [vmem:[#allocation8 + $0x1d0] sm:$0xff]
    %v678 = vld [vmem:[#allocation8 + $0x1d8] sm:$0xff]
    %v679 = vld [vmem:[#allocation8 + $0x1e0] sm:$0xff]
    %v680 = vld [vmem:[#allocation8 + $0x1e8] sm:$0xff]
    %v681 = vld [vmem:[#allocation8 + $0x1f0] sm:$0xff]
    %v682 = vld [vmem:[#allocation8 + $0x1f8] sm:$0xff]
    %v683 = vld [vmem:[#allocation8 + $0x200] sm:$0xff]
    %v684 = vld [vmem:[#allocation8 + $0x208] sm:$0xff]
    %v685 = vld [vmem:[#allocation8 + $0x210] sm:$0xff]
    %v686 = vld [vmem:[#allocation8 + $0x218] sm:$0xff]
    %v687 = vld [vmem:[#allocation8 + $0x220] sm:$0xff]
    %v688 = vld [vmem:[#allocation8 + $0x228] sm:$0xff]
    %v689 = vld [vmem:[#allocation8 + $0x230] sm:$0xff]
    %v690 = vld [vmem:[#allocation8 + $0x238] sm:$0xff]
    %v691 = vld [vmem:[#allocation8 + $0x240] sm:$0xff]
    %v692 = vld [vmem:[#allocation8 + $0x248] sm:$0xff]
    %v693 = vld [vmem:[#allocation8 + $0x250] sm:$0xff]
    %v694 = vld [vmem:[#allocation8 + $0x258] sm:$0xff]
    %v695 = vld [vmem:[#allocation8 + $0x260] sm:$0xff]
    %v696 = vld [vmem:[#allocation8 + $0x268] sm:$0xff]
    %v697 = vld [vmem:[#allocation8 + $0x270] sm:$0xff]
    %v698 = vld [vmem:[#allocation8 + $0x278] sm:$0xff]
    %v699 = vld [vmem:[#allocation8 + $0x280] sm:$0xff]
    %v700 = vld [vmem:[#allocation8 + $0x288] sm:$0xff]
    %v701 = vld [vmem:[#allocation8 + $0x290] sm:$0xff]
    %v702 = vld [vmem:[#allocation8 + $0x298] sm:$0xff]
    %v703 = vld [vmem:[#allocation8 + $0x2a0] sm:$0xff]
    %v704 = vld [vmem:[#allocation8 + $0x2a8] sm:$0xff]
    %v705 = vld [vmem:[#allocation8 + $0x2b0] sm:$0xff]
    %v706 = vld [vmem:[#allocation8 + $0x2b8] sm:$0xff]
    %v707 = vld [vmem:[#allocation8 + $0x2c0] sm:$0xff]
    %v708 = vld [vmem:[#allocation8 + $0x2c8] sm:$0xff]
    %v709 = vld [vmem:[#allocation8 + $0x2d0] sm:$0xff]
    %v710 = vld [vmem:[#allocation8 + $0x2d8] sm:$0xff]
    %v711 = vld [vmem:[#allocation8 + $0x2e0] sm:$0xff]
    %v712 = vld [vmem:[#allocation8 + $0x2e8] sm:$0xff]
    %v713 = vld [vmem:[#allocation8 + $0x2f0] sm:$0xff]
    %v714 = vld [vmem:[#allocation8 + $0x2f8] sm:$0xff]
    %v715 = vld [vmem:[#allocation8 + $0x300] sm:$0xff]
    %v716 = vld [vmem:[#allocation8 + $0x308] sm:$0xff]
    %v717 = vld [vmem:[#allocation8 + $0x310] sm:$0xff]
    %v718 = vld [vmem:[#allocation8 + $0x318] sm:$0xff]
    %v719 = vld [vmem:[#allocation8 + $0x320] sm:$0xff]
    %v720 = vld [vmem:[#allocation8 + $0x328] sm:$0xff]
    %v721 = vld [vmem:[#allocation8 + $0x330] sm:$0xff]
    %v722 = vld [vmem:[#allocation8 + $0x338] sm:$0xff]
    %v723 = vld [vmem:[#allocation8 + $0x340] sm:$0xff]
    %v724 = vld [vmem:[#allocation8 + $0x348] sm:$0xff]
    %v725 = vld [vmem:[#allocation8 + $0x350] sm:$0xff]
    %v726 = vld [vmem:[#allocation8 + $0x358] sm:$0xff]
    %v727 = vld [vmem:[#allocation8 + $0x360] sm:$0xff]
    %v728 = vld [vmem:[#allocation8 + $0x368] sm:$0xff]
    %v729 = vld [vmem:[#allocation8 + $0x370] sm:$0xff]
    %v730 = vld [vmem:[#allocation8 + $0x378] sm:$0xff]
    %v731 = vld [vmem:[#allocation8 + $0x380] sm:$0xff]
    %v732 = vld [vmem:[#allocation8 + $0x388] sm:$0xff]
    %v733 = vld [vmem:[#allocation8 + $0x390] sm:$0xff]
    %v734 = vld [vmem:[#allocation8 + $0x398] sm:$0xff]
    %v735 = vld [vmem:[#allocation8 + $0x3a0] sm:$0xff]
    %v736 = vld [vmem:[#allocation8 + $0x3a8] sm:$0xff]
    %v737 = vld [vmem:[#allocation8 + $0x3b0] sm:$0xff]
    %v738 = vld [vmem:[#allocation8 + $0x3b8] sm:$0xff]
    %v739 = vld [vmem:[#allocation8 + $0x3c0] sm:$0xff]
    %v740 = vld [vmem:[#allocation8 + $0x3c8] sm:$0xff]
    %v741 = vld [vmem:[#allocation8 + $0x3d0] sm:$0xff]
    %v742 = vld [vmem:[#allocation8 + $0x3d8] sm:$0xff]
    %v743 = vld [vmem:[#allocation8 + $0x3e0] sm:$0xff]
    %v744 = vld [vmem:[#allocation8 + $0x3e8] sm:$0xff]
    %v745 = vld [vmem:[#allocation8 + $0x3f0] sm:$0xff]
    %v746 = vld [vmem:[#allocation8 + $0x3f8] sm:$0xff]
    %v747 = vld [vmem:[#allocation10] sm:$0xf]
    %v749 = vperm.slane %v747, 0
    %v750 = vperm.slane %v747, 1
    %v751 = vperm.slane %v747, 2
    %v752 = vperm.slane %v747, 3
    %v885 = vunpack.c.l.b16 %v619
    %v886 = vunpack.c.h.b16 %v619
    %v887 = vunpack.c.l.b16 %v620
    %v888 = vunpack.c.h.b16 %v620
    %v889 = vunpack.c.l.b16 %v621
    %v890 = vunpack.c.h.b16 %v621
    %v891 = vunpack.c.l.b16 %v622
    %v892 = vunpack.c.h.b16 %v622
    %v893 = vunpack.c.l.b16 %v623
    %v894 = vunpack.c.h.b16 %v623
    %v895 = vunpack.c.l.b16 %v624
    %v896 = vunpack.c.h.b16 %v624
    %v897 = vunpack.c.l.b16 %v625
    %v898 = vunpack.c.h.b16 %v625
    %v899 = vunpack.c.l.b16 %v626
    %v900 = vunpack.c.h.b16 %v626
    %v901 = vunpack.c.l.b16 %v627
    %v902 = vunpack.c.h.b16 %v627
    %v903 = vunpack.c.l.b16 %v628
    %v904 = vunpack.c.h.b16 %v628
    %v905 = vunpack.c.l.b16 %v629
    %v906 = vunpack.c.h.b16 %v629
    %v907 = vunpack.c.l.b16 %v630
    %v908 = vunpack.c.h.b16 %v630
    %v909 = vunpack.c.l.b16 %v631
    %v910 = vunpack.c.h.b16 %v631
    %v911 = vunpack.c.l.b16 %v632
    %v912 = vunpack.c.h.b16 %v632
    %v913 = vunpack.c.l.b16 %v633
    %v914 = vunpack.c.h.b16 %v633
    %v915 = vunpack.c.l.b16 %v634
    %v916 = vunpack.c.h.b16 %v634
    %v917 = vunpack.c.l.b16 %v635
    %v918 = vunpack.c.h.b16 %v635
    %v919 = vunpack.c.l.b16 %v636
    %v920 = vunpack.c.h.b16 %v636
    %v921 = vunpack.c.l.b16 %v637
    %v922 = vunpack.c.h.b16 %v637
    %v923 = vunpack.c.l.b16 %v638
    %v924 = vunpack.c.h.b16 %v638
    %v925 = vunpack.c.l.b16 %v639
    %v926 = vunpack.c.h.b16 %v639
    %v927 = vunpack.c.l.b16 %v640
    %v928 = vunpack.c.h.b16 %v640
    %v929 = vunpack.c.l.b16 %v641
    %v930 = vunpack.c.h.b16 %v641
    %v931 = vunpack.c.l.b16 %v642
    %v932 = vunpack.c.h.b16 %v642
    %v933 = vunpack.c.l.b16 %v643
    %v934 = vunpack.c.h.b16 %v643
    %v935 = vunpack.c.l.b16 %v644
    %v936 = vunpack.c.h.b16 %v644
    %v937 = vunpack.c.l.b16 %v645
    %v938 = vunpack.c.h.b16 %v645
    %v939 = vunpack.c.l.b16 %v646
    %v940 = vunpack.c.h.b16 %v646
    %v941 = vunpack.c.l.b16 %v647
    %v942 = vunpack.c.h.b16 %v647
    %v943 = vunpack.c.l.b16 %v648
    %v944 = vunpack.c.h.b16 %v648
    %v945 = vunpack.c.l.b16 %v649
    %v946 = vunpack.c.h.b16 %v649
    %v947 = vunpack.c.l.b16 %v650
    %v948 = vunpack.c.h.b16 %v650
    %v949 = vunpack.c.l.b16 %v651
    %v950 = vunpack.c.h.b16 %v651
    %v951 = vunpack.c.l.b16 %v652
    %v952 = vunpack.c.h.b16 %v652
    %v953 = vunpack.c.l.b16 %v653
    %v954 = vunpack.c.h.b16 %v653
    %v955 = vunpack.c.l.b16 %v654
    %v956 = vunpack.c.h.b16 %v654
    %v957 = vunpack.c.l.b16 %v655
    %v958 = vunpack.c.h.b16 %v655
    %v959 = vunpack.c.l.b16 %v656
    %v960 = vunpack.c.h.b16 %v656
    %v961 = vunpack.c.l.b16 %v657
    %v962 = vunpack.c.h.b16 %v657
    %v963 = vunpack.c.l.b16 %v658
    %v964 = vunpack.c.h.b16 %v658
    %v965 = vunpack.c.l.b16 %v659
    %v966 = vunpack.c.h.b16 %v659
    %v967 = vunpack.c.l.b16 %v660
    %v968 = vunpack.c.h.b16 %v660
    %v969 = vunpack.c.l.b16 %v661
    %v970 = vunpack.c.h.b16 %v661
    %v971 = vunpack.c.l.b16 %v662
    %v972 = vunpack.c.h.b16 %v662
    %v973 = vunpack.c.l.b16 %v663
    %v974 = vunpack.c.h.b16 %v663
    %v975 = vunpack.c.l.b16 %v664
    %v976 = vunpack.c.h.b16 %v664
    %v977 = vunpack.c.l.b16 %v665
    %v978 = vunpack.c.h.b16 %v665
    %v979 = vunpack.c.l.b16 %v666
    %v980 = vunpack.c.h.b16 %v666
    %v981 = vunpack.c.l.b16 %v667
    %v982 = vunpack.c.h.b16 %v667
    %v983 = vunpack.c.l.b16 %v668
    %v984 = vunpack.c.h.b16 %v668
    %v985 = vunpack.c.l.b16 %v669
    %v986 = vunpack.c.h.b16 %v669
    %v987 = vunpack.c.l.b16 %v670
    %v988 = vunpack.c.h.b16 %v670
    %v989 = vunpack.c.l.b16 %v671
    %v990 = vunpack.c.h.b16 %v671
    %v991 = vunpack.c.l.b16 %v672
    %v992 = vunpack.c.h.b16 %v672
    %v993 = vunpack.c.l.b16 %v673
    %v994 = vunpack.c.h.b16 %v673
    %v995 = vunpack.c.l.b16 %v674
    %v996 = vunpack.c.h.b16 %v674
    %v997 = vunpack.c.l.b16 %v675
    %v998 = vunpack.c.h.b16 %v675
    %v999 = vunpack.c.l.b16 %v676
    %v1000 = vunpack.c.h.b16 %v676
    %v1001 = vunpack.c.l.b16 %v677
    %v1002 = vunpack.c.h.b16 %v677
    %v1003 = vunpack.c.l.b16 %v678
    %v1004 = vunpack.c.h.b16 %v678
    %v1005 = vunpack.c.l.b16 %v679
    %v1006 = vunpack.c.h.b16 %v679
    %v1007 = vunpack.c.l.b16 %v680
    %v1008 = vunpack.c.h.b16 %v680
    %v1009 = vunpack.c.l.b16 %v681
    %v1010 = vunpack.c.h.b16 %v681
    %v1011 = vunpack.c.l.b16 %v682
    %v1012 = vunpack.c.h.b16 %v682
    %v1013 = vunpack.c.l.b16 %v683
    %v1014 = vunpack.c.h.b16 %v683
    %v1015 = vunpack.c.l.b16 %v684
    %v1016 = vunpack.c.h.b16 %v684
    %v1017 = vunpack.c.l.b16 %v685
    %v1018 = vunpack.c.h.b16 %v685
    %v1019 = vunpack.c.l.b16 %v686
    %v1020 = vunpack.c.h.b16 %v686
    %v1021 = vunpack.c.l.b16 %v687
    %v1022 = vunpack.c.h.b16 %v687
    %v1023 = vunpack.c.l.b16 %v688
    %v1024 = vunpack.c.h.b16 %v688
    %v1025 = vunpack.c.l.b16 %v689
    %v1026 = vunpack.c.h.b16 %v689
    %v1027 = vunpack.c.l.b16 %v690
    %v1028 = vunpack.c.h.b16 %v690
    %v1029 = vunpack.c.l.b16 %v691
    %v1030 = vunpack.c.h.b16 %v691
    %v1031 = vunpack.c.l.b16 %v692
    %v1032 = vunpack.c.h.b16 %v692
    %v1033 = vunpack.c.l.b16 %v693
    %v1034 = vunpack.c.h.b16 %v693
    %v1035 = vunpack.c.l.b16 %v694
    %v1036 = vunpack.c.h.b16 %v694
    %v1037 = vunpack.c.l.b16 %v695
    %v1038 = vunpack.c.h.b16 %v695
    %v1039 = vunpack.c.l.b16 %v696
    %v1040 = vunpack.c.h.b16 %v696
    %v1041 = vunpack.c.l.b16 %v697
    %v1042 = vunpack.c.h.b16 %v697
    %v1043 = vunpack.c.l.b16 %v698
    %v1044 = vunpack.c.h.b16 %v698
    %v1045 = vunpack.c.l.b16 %v699
    %v1046 = vunpack.c.h.b16 %v699
    %v1047 = vunpack.c.l.b16 %v700
    %v1048 = vunpack.c.h.b16 %v700
    %v1049 = vunpack.c.l.b16 %v701
    %v1050 = vunpack.c.h.b16 %v701
    %v1051 = vunpack.c.l.b16 %v702
    %v1052 = vunpack.c.h.b16 %v702
    %v1053 = vunpack.c.l.b16 %v703
    %v1054 = vunpack.c.h.b16 %v703
    %v1055 = vunpack.c.l.b16 %v704
    %v1056 = vunpack.c.h.b16 %v704
    %v1057 = vunpack.c.l.b16 %v705
    %v1058 = vunpack.c.h.b16 %v705
    %v1059 = vunpack.c.l.b16 %v706
    %v1060 = vunpack.c.h.b16 %v706
    %v1061 = vunpack.c.l.b16 %v707
    %v1062 = vunpack.c.h.b16 %v707
    %v1063 = vunpack.c.l.b16 %v708
    %v1064 = vunpack.c.h.b16 %v708
    %v1065 = vunpack.c.l.b16 %v709
    %v1066 = vunpack.c.h.b16 %v709
    %v1067 = vunpack.c.l.b16 %v710
    %v1068 = vunpack.c.h.b16 %v710
    %v1069 = vunpack.c.l.b16 %v711
    %v1070 = vunpack.c.h.b16 %v711
    %v1071 = vunpack.c.l.b16 %v712
    %v1072 = vunpack.c.h.b16 %v712
    %v1073 = vunpack.c.l.b16 %v713
    %v1074 = vunpack.c.h.b16 %v713
    %v1075 = vunpack.c.l.b16 %v714
    %v1076 = vunpack.c.h.b16 %v714
    %v1077 = vunpack.c.l.b16 %v715
    %v1078 = vunpack.c.h.b16 %v715
    %v1079 = vunpack.c.l.b16 %v716
    %v1080 = vunpack.c.h.b16 %v716
    %v1081 = vunpack.c.l.b16 %v717
    %v1082 = vunpack.c.h.b16 %v717
    %v1083 = vunpack.c.l.b16 %v718
    %v1084 = vunpack.c.h.b16 %v718
    %v1085 = vunpack.c.l.b16 %v719
    %v1086 = vunpack.c.h.b16 %v719
    %v1087 = vunpack.c.l.b16 %v720
    %v1088 = vunpack.c.h.b16 %v720
    %v1089 = vunpack.c.l.b16 %v721
    %v1090 = vunpack.c.h.b16 %v721
    %v1091 = vunpack.c.l.b16 %v722
    %v1092 = vunpack.c.h.b16 %v722
    %v1093 = vunpack.c.l.b16 %v723
    %v1094 = vunpack.c.h.b16 %v723
    %v1095 = vunpack.c.l.b16 %v724
    %v1096 = vunpack.c.h.b16 %v724
    %v1097 = vunpack.c.l.b16 %v725
    %v1098 = vunpack.c.h.b16 %v725
    %v1099 = vunpack.c.l.b16 %v726
    %v1100 = vunpack.c.h.b16 %v726
    %v1101 = vunpack.c.l.b16 %v727
    %v1102 = vunpack.c.h.b16 %v727
    %v1103 = vunpack.c.l.b16 %v728
    %v1104 = vunpack.c.h.b16 %v728
    %v1105 = vunpack.c.l.b16 %v729
    %v1106 = vunpack.c.h.b16 %v729
    %v1107 = vunpack.c.l.b16 %v730
    %v1108 = vunpack.c.h.b16 %v730
    %v1109 = vunpack.c.l.b16 %v731
    %v1110 = vunpack.c.h.b16 %v731
    %v1111 = vunpack.c.l.b16 %v732
    %v1112 = vunpack.c.h.b16 %v732
    %v1113 = vunpack.c.l.b16 %v733
    %v1114 = vunpack.c.h.b16 %v733
    %v1115 = vunpack.c.l.b16 %v734
    %v1116 = vunpack.c.h.b16 %v734
    %v1117 = vunpack.c.l.b16 %v735
    %v1118 = vunpack.c.h.b16 %v735
    %v1119 = vunpack.c.l.b16 %v736
    %v1120 = vunpack.c.h.b16 %v736
    %v1121 = vunpack.c.l.b16 %v737
    %v1122 = vunpack.c.h.b16 %v737
    %v1123 = vunpack.c.l.b16 %v738
    %v1124 = vunpack.c.h.b16 %v738
    %v1125 = vunpack.c.l.b16 %v739
    %v1126 = vunpack.c.h.b16 %v739
    %v1127 = vunpack.c.l.b16 %v740
    %v1128 = vunpack.c.h.b16 %v740
    %v1129 = vunpack.c.l.b16 %v741
    %v1130 = vunpack.c.h.b16 %v741
    %v1131 = vunpack.c.l.b16 %v742
    %v1132 = vunpack.c.h.b16 %v742
    %v1133 = vunpack.c.l.b16 %v743
    %v1134 = vunpack.c.h.b16 %v743
    %v1135 = vunpack.c.l.b16 %v744
    %v1136 = vunpack.c.h.b16 %v744
    %v1137 = vunpack.c.l.b16 %v745
    %v1138 = vunpack.c.h.b16 %v745
    %v1139 = vunpack.c.l.b16 %v746
    %v1140 = vunpack.c.h.b16 %v746
    %v1141 = vpack.c.b16 %v889, %v885
    %v1142 = vpack.c.b16 %v890, %v886
    %v1143 = vpack.c.b16 %v891, %v887
    %v1144 = vpack.c.b16 %v892, %v888
    %v1145 = vpack.c.b16 %v897, %v893
    %v1146 = vpack.c.b16 %v898, %v894
    %v1147 = vpack.c.b16 %v899, %v895
    %v1148 = vpack.c.b16 %v900, %v896
    %v1149 = vpack.c.b16 %v905, %v901
    %v1150 = vpack.c.b16 %v906, %v902
    %v1151 = vpack.c.b16 %v907, %v903
    %v1152 = vpack.c.b16 %v908, %v904
    %v1153 = vpack.c.b16 %v913, %v909
    %v1154 = vpack.c.b16 %v914, %v910
    %v1155 = vpack.c.b16 %v915, %v911
    %v1156 = vpack.c.b16 %v916, %v912
    %v1157 = vpack.c.b16 %v921, %v917
    %v1158 = vpack.c.b16 %v922, %v918
    %v1159 = vpack.c.b16 %v923, %v919
    %v1160 = vpack.c.b16 %v924, %v920
    %v1161 = vpack.c.b16 %v929, %v925
    %v1162 = vpack.c.b16 %v930, %v926
    %v1163 = vpack.c.b16 %v931, %v927
    %v1164 = vpack.c.b16 %v932, %v928
    %v1165 = vpack.c.b16 %v937, %v933
    %v1166 = vpack.c.b16 %v938, %v934
    %v1167 = vpack.c.b16 %v939, %v935
    %v1168 = vpack.c.b16 %v940, %v936
    %v1169 = vpack.c.b16 %v945, %v941
    %v1170 = vpack.c.b16 %v946, %v942
    %v1171 = vpack.c.b16 %v947, %v943
    %v1172 = vpack.c.b16 %v948, %v944
    %v1173 = vpack.c.b16 %v953, %v949
    %v1174 = vpack.c.b16 %v954, %v950
    %v1175 = vpack.c.b16 %v955, %v951
    %v1176 = vpack.c.b16 %v956, %v952
    %v1177 = vpack.c.b16 %v961, %v957
    %v1178 = vpack.c.b16 %v962, %v958
    %v1179 = vpack.c.b16 %v963, %v959
    %v1180 = vpack.c.b16 %v964, %v960
    %v1181 = vpack.c.b16 %v969, %v965
    %v1182 = vpack.c.b16 %v970, %v966
    %v1183 = vpack.c.b16 %v971, %v967
    %v1184 = vpack.c.b16 %v972, %v968
    %v1185 = vpack.c.b16 %v977, %v973
    %v1186 = vpack.c.b16 %v978, %v974
    %v1187 = vpack.c.b16 %v979, %v975
    %v1188 = vpack.c.b16 %v980, %v976
    %v1189 = vpack.c.b16 %v985, %v981
    %v1190 = vpack.c.b16 %v986, %v982
    %v1191 = vpack.c.b16 %v987, %v983
    %v1192 = vpack.c.b16 %v988, %v984
    %v1193 = vpack.c.b16 %v993, %v989
    %v1194 = vpack.c.b16 %v994, %v990
    %v1195 = vpack.c.b16 %v995, %v991
    %v1196 = vpack.c.b16 %v996, %v992
    %v1197 = vpack.c.b16 %v1001, %v997
    %v1198 = vpack.c.b16 %v1002, %v998
    %v1199 = vpack.c.b16 %v1003, %v999
    %v1200 = vpack.c.b16 %v1004, %v1000
    %v1201 = vpack.c.b16 %v1009, %v1005
    %v1202 = vpack.c.b16 %v1010, %v1006
    %v1203 = vpack.c.b16 %v1011, %v1007
    %v1204 = vpack.c.b16 %v1012, %v1008
    %v1205 = vpack.c.b16 %v1017, %v1013
    %v1206 = vpack.c.b16 %v1018, %v1014
    %v1207 = vpack.c.b16 %v1019, %v1015
    %v1208 = vpack.c.b16 %v1020, %v1016
    %v1209 = vpack.c.b16 %v1025, %v1021
    %v1210 = vpack.c.b16 %v1026, %v1022
    %v1211 = vpack.c.b16 %v1027, %v1023
    %v1212 = vpack.c.b16 %v1028, %v1024
    %v1213 = vpack.c.b16 %v1033, %v1029
    %v1214 = vpack.c.b16 %v1034, %v1030
    %v1215 = vpack.c.b16 %v1035, %v1031
    %v1216 = vpack.c.b16 %v1036, %v1032
    %v1217 = vpack.c.b16 %v1041, %v1037
    %v1218 = vpack.c.b16 %v1042, %v1038
    %v1219 = vpack.c.b16 %v1043, %v1039
    %v1220 = vpack.c.b16 %v1044, %v1040
    %v1221 = vpack.c.b16 %v1049, %v1045
    %v1222 = vpack.c.b16 %v1050, %v1046
    %v1223 = vpack.c.b16 %v1051, %v1047
    %v1224 = vpack.c.b16 %v1052, %v1048
    %v1225 = vpack.c.b16 %v1057, %v1053
    %v1226 = vpack.c.b16 %v1058, %v1054
    %v1227 = vpack.c.b16 %v1059, %v1055
    %v1228 = vpack.c.b16 %v1060, %v1056
    %v1229 = vpack.c.b16 %v1065, %v1061
    %v1230 = vpack.c.b16 %v1066, %v1062
    %v1231 = vpack.c.b16 %v1067, %v1063
    %v1232 = vpack.c.b16 %v1068, %v1064
    %v1233 = vpack.c.b16 %v1073, %v1069
    %v1234 = vpack.c.b16 %v1074, %v1070
    %v1235 = vpack.c.b16 %v1075, %v1071
    %v1236 = vpack.c.b16 %v1076, %v1072
    %v1237 = vpack.c.b16 %v1081, %v1077
    %v1238 = vpack.c.b16 %v1082, %v1078
    %v1239 = vpack.c.b16 %v1083, %v1079
    %v1240 = vpack.c.b16 %v1084, %v1080
    %v1241 = vpack.c.b16 %v1089, %v1085
    %v1242 = vpack.c.b16 %v1090, %v1086
    %v1243 = vpack.c.b16 %v1091, %v1087
    %v1244 = vpack.c.b16 %v1092, %v1088
    %v1245 = vpack.c.b16 %v1097, %v1093
    %v1246 = vpack.c.b16 %v1098, %v1094
    %v1247 = vpack.c.b16 %v1099, %v1095
    %v1248 = vpack.c.b16 %v1100, %v1096
    %v1249 = vpack.c.b16 %v1105, %v1101
    %v1250 = vpack.c.b16 %v1106, %v1102
    %v1251 = vpack.c.b16 %v1107, %v1103
    %v1252 = vpack.c.b16 %v1108, %v1104
    %v1253 = vpack.c.b16 %v1113, %v1109
    %v1254 = vpack.c.b16 %v1114, %v1110
    %v1255 = vpack.c.b16 %v1115, %v1111
    %v1256 = vpack.c.b16 %v1116, %v1112
    %v1257 = vpack.c.b16 %v1121, %v1117
    %v1258 = vpack.c.b16 %v1122, %v1118
    %v1259 = vpack.c.b16 %v1123, %v1119
    %v1260 = vpack.c.b16 %v1124, %v1120
    %v1261 = vpack.c.b16 %v1129, %v1125
    %v1262 = vpack.c.b16 %v1130, %v1126
    %v1263 = vpack.c.b16 %v1131, %v1127
    %v1264 = vpack.c.b16 %v1132, %v1128
    %v1265 = vpack.c.b16 %v1137, %v1133
    %v1266 = vpack.c.b16 %v1138, %v1134
    %v1267 = vpack.c.b16 %v1139, %v1135
    %v1268 = vpack.c.b16 %v1140, %v1136
    %1397 = vmatpush.bf16.msra.mxu0 %v1169
    %1398 = vmatpush.bf16.msra.mxu0 %v1165
    %1399 = vmatpush.bf16.msra.mxu0 %v1161
    %1400 = vmatpush.bf16.msra.mxu0 %v1157
    %1401 = vmatpush.bf16.msra.mxu0 %v1153
    %1402 = vmatpush.bf16.msra.mxu0 %v1149
    %1403 = vmatpush.bf16.msra.mxu0 %v1145
    %1404 = vmatpush.bf16.msra.mxu0 %v1141
    %1405 = vmatmul.bf16.gmra.mxu0 %v615
    %v1406 = vpop.f32.mrf.mxu0
    %v1407 = vadd.f32 %v749, %v1406
    %v1408 = vpop.f32.mrf.mxu0
    %v1409 = vadd.f32 %v749, %v1408
    %1410 = vdwg.mxu0
    %1411 = vmatpush.bf16.msra.mxu0 %v1201
    %1412 = vmatpush.bf16.msra.mxu0 %v1197
    %1413 = vmatpush.bf16.msra.mxu0 %v1193
    %1414 = vmatpush.bf16.msra.mxu0 %v1189
    %1415 = vmatpush.bf16.msra.mxu0 %v1185
    %1416 = vmatpush.bf16.msra.mxu0 %v1181
    %1417 = vmatpush.bf16.msra.mxu0 %v1177
    %1418 = vmatpush.bf16.msra.mxu0 %v1173
    %1419 = vmatmul.bf16.gmra.mxu0 %v616
    %v1420 = vpop.f32.mrf.mxu0
    %v1421 = vadd.f32 %v1407, %v1420
    %v1422 = vpop.f32.mrf.mxu0
    %v1423 = vadd.f32 %v1409, %v1422
    %1424 = vdwg.mxu0
    %1425 = vmatpush.bf16.msra.mxu0 %v1233
    %1426 = vmatpush.bf16.msra.mxu0 %v1229
    %1427 = vmatpush.bf16.msra.mxu0 %v1225
    %1428 = vmatpush.bf16.msra.mxu0 %v1221
    %1429 = vmatpush.bf16.msra.mxu0 %v1217
    %1430 = vmatpush.bf16.msra.mxu0 %v1213
    %1431 = vmatpush.bf16.msra.mxu0 %v1209
    %1432 = vmatpush.bf16.msra.mxu0 %v1205
    %1433 = vmatmul.bf16.gmra.mxu0 %v617
    %v1434 = vpop.f32.mrf.mxu0
    %v1435 = vadd.f32 %v1421, %v1434
    %v1436 = vpop.f32.mrf.mxu0
    %v1437 = vadd.f32 %v1423, %v1436
    %1438 = vdwg.mxu0
    %1439 = vmatpush.bf16.msra.mxu0 %v1265
    %1440 = vmatpush.bf16.msra.mxu0 %v1261
    %1441 = vmatpush.bf16.msra.mxu0 %v1257
    %1442 = vmatpush.bf16.msra.mxu0 %v1253
    %1443 = vmatpush.bf16.msra.mxu0 %v1249
    %1444 = vmatpush.bf16.msra.mxu0 %v1245
    %1445 = vmatpush.bf16.msra.mxu0 %v1241
    %1446 = vmatpush.bf16.msra.mxu0 %v1237
    %1447 = vmatmul.bf16.gmra.mxu0 %v618
    %v1448 = vpop.f32.mrf.mxu0
    %v1449 = vadd.f32 %v1435, %v1448
    %v1450 = vpop.f32.mrf.mxu0
    %v1451 = vadd.f32 %v1437, %v1450
    %1452 = vdwg.mxu0
    %1453 = vmatpush.bf16.msra.mxu0 %v1170
    %1454 = vmatpush.bf16.msra.mxu0 %v1166
    %1455 = vmatpush.bf16.msra.mxu0 %v1162
    %1456 = vmatpush.bf16.msra.mxu0 %v1158
    %1457 = vmatpush.bf16.msra.mxu0 %v1154
    %1458 = vmatpush.bf16.msra.mxu0 %v1150
    %1459 = vmatpush.bf16.msra.mxu0 %v1146
    %1460 = vmatpush.bf16.msra.mxu0 %v1142
    %1461 = vmatmul.bf16.gmra.mxu0 %v615
    %v1462 = vpop.f32.mrf.mxu0
    %v1463 = vadd.f32 %v750, %v1462
    %v1464 = vpop.f32.mrf.mxu0
    %v1465 = vadd.f32 %v750, %v1464
    %1466 = vdwg.mxu0
    %1467 = vmatpush.bf16.msra.mxu0 %v1202
    %1468 = vmatpush.bf16.msra.mxu0 %v1198
    %1469 = vmatpush.bf16.msra.mxu0 %v1194
    %1470 = vmatpush.bf16.msra.mxu0 %v1190
    %1471 = vmatpush.bf16.msra.mxu0 %v1186
    %1472 = vmatpush.bf16.msra.mxu0 %v1182
    %1473 = vmatpush.bf16.msra.mxu0 %v1178
    %1474 = vmatpush.bf16.msra.mxu0 %v1174
    %1475 = vmatmul.bf16.gmra.mxu0 %v616
    %v1476 = vpop.f32.mrf.mxu0
    %v1477 = vadd.f32 %v1463, %v1476
    %v1478 = vpop.f32.mrf.mxu0
    %v1479 = vadd.f32 %v1465, %v1478
    %1480 = vdwg.mxu0
    %1481 = vmatpush.bf16.msra.mxu0 %v1234
    %1482 = vmatpush.bf16.msra.mxu0 %v1230
    %1483 = vmatpush.bf16.msra.mxu0 %v1226
    %1484 = vmatpush.bf16.msra.mxu0 %v1222
    %1485 = vmatpush.bf16.msra.mxu0 %v1218
    %1486 = vmatpush.bf16.msra.mxu0 %v1214
    %1487 = vmatpush.bf16.msra.mxu0 %v1210
    %1488 = vmatpush.bf16.msra.mxu0 %v1206
    %1489 = vmatmul.bf16.gmra.mxu0 %v617
    %v1490 = vpop.f32.mrf.mxu0
    %v1491 = vadd.f32 %v1477, %v1490
    %v1492 = vpop.f32.mrf.mxu0
    %v1493 = vadd.f32 %v1479, %v1492
    %1494 = vdwg.mxu0
    %1495 = vmatpush.bf16.msra.mxu0 %v1266
    %1496 = vmatpush.bf16.msra.mxu0 %v1262
    %1497 = vmatpush.bf16.msra.mxu0 %v1258
    %1498 = vmatpush.bf16.msra.mxu0 %v1254
    %1499 = vmatpush.bf16.msra.mxu0 %v1250
    %1500 = vmatpush.bf16.msra.mxu0 %v1246
    %1501 = vmatpush.bf16.msra.mxu0 %v1242
    %1502 = vmatpush.bf16.msra.mxu0 %v1238
    %1503 = vmatmul.bf16.gmra.mxu0 %v618
    %v1504 = vpop.f32.mrf.mxu0
    %v1505 = vadd.f32 %v1491, %v1504
    %v1506 = vpop.f32.mrf.mxu0
    %v1507 = vadd.f32 %v1493, %v1506
    %1508 = vdwg.mxu0
    %1509 = vmatpush.bf16.msra.mxu0 %v1171
    %1510 = vmatpush.bf16.msra.mxu0 %v1167
    %1511 = vmatpush.bf16.msra.mxu0 %v1163
    %1512 = vmatpush.bf16.msra.mxu0 %v1159
    %1513 = vmatpush.bf16.msra.mxu0 %v1155
    %1514 = vmatpush.bf16.msra.mxu0 %v1151
    %1515 = vmatpush.bf16.msra.mxu0 %v1147
    %1516 = vmatpush.bf16.msra.mxu0 %v1143
    %1517 = vmatmul.bf16.gmra.mxu0 %v615
    %v1518 = vpop.f32.mrf.mxu0
    %v1519 = vadd.f32 %v751, %v1518
    %v1520 = vpop.f32.mrf.mxu0
    %v1521 = vadd.f32 %v751, %v1520
    %1522 = vdwg.mxu0
    %1523 = vmatpush.bf16.msra.mxu0 %v1203
    %1524 = vmatpush.bf16.msra.mxu0 %v1199
    %1525 = vmatpush.bf16.msra.mxu0 %v1195
    %1526 = vmatpush.bf16.msra.mxu0 %v1191
    %1527 = vmatpush.bf16.msra.mxu0 %v1187
    %1528 = vmatpush.bf16.msra.mxu0 %v1183
    %1529 = vmatpush.bf16.msra.mxu0 %v1179
    %1530 = vmatpush.bf16.msra.mxu0 %v1175
    %1531 = vmatmul.bf16.gmra.mxu0 %v616
    %v1532 = vpop.f32.mrf.mxu0
    %v1533 = vadd.f32 %v1519, %v1532
    %v1534 = vpop.f32.mrf.mxu0
    %v1535 = vadd.f32 %v1521, %v1534
    %1536 = vdwg.mxu0
    %1537 = vmatpush.bf16.msra.mxu0 %v1235
    %1538 = vmatpush.bf16.msra.mxu0 %v1231
    %1539 = vmatpush.bf16.msra.mxu0 %v1227
    %1540 = vmatpush.bf16.msra.mxu0 %v1223
    %1541 = vmatpush.bf16.msra.mxu0 %v1219
    %1542 = vmatpush.bf16.msra.mxu0 %v1215
    %1543 = vmatpush.bf16.msra.mxu0 %v1211
    %1544 = vmatpush.bf16.msra.mxu0 %v1207
    %1545 = vmatmul.bf16.gmra.mxu0 %v617
    %v1546 = vpop.f32.mrf.mxu0
    %v1547 = vadd.f32 %v1533, %v1546
    %v1548 = vpop.f32.mrf.mxu0
    %v1549 = vadd.f32 %v1535, %v1548
    %1550 = vdwg.mxu0
    %1551 = vmatpush.bf16.msra.mxu0 %v1267
    %1552 = vmatpush.bf16.msra.mxu0 %v1263
    %1553 = vmatpush.bf16.msra.mxu0 %v1259
    %1554 = vmatpush.bf16.msra.mxu0 %v1255
    %1555 = vmatpush.bf16.msra.mxu0 %v1251
    %1556 = vmatpush.bf16.msra.mxu0 %v1247
    %1557 = vmatpush.bf16.msra.mxu0 %v1243
    %1558 = vmatpush.bf16.msra.mxu0 %v1239
    %1559 = vmatmul.bf16.gmra.mxu0 %v618
    %v1560 = vpop.f32.mrf.mxu0
    %v1561 = vadd.f32 %v1547, %v1560
    %v1562 = vpop.f32.mrf.mxu0
    %v1563 = vadd.f32 %v1549, %v1562
    %1564 = vdwg.mxu0
    %1565 = vmatpush.bf16.msra.mxu0 %v1172
    %1566 = vmatpush.bf16.msra.mxu0 %v1168
    %1567 = vmatpush.bf16.msra.mxu0 %v1164
    %1568 = vmatpush.bf16.msra.mxu0 %v1160
    %1569 = vmatpush.bf16.msra.mxu0 %v1156
    %1570 = vmatpush.bf16.msra.mxu0 %v1152
    %1571 = vmatpush.bf16.msra.mxu0 %v1148
    %1572 = vmatpush.bf16.msra.mxu0 %v1144
    %1573 = vmatmul.bf16.gmra.mxu0 %v615
    %v1574 = vpop.f32.mrf.mxu0
    %v1575 = vadd.f32 %v752, %v1574
    %v1576 = vpop.f32.mrf.mxu0
    %v1577 = vadd.f32 %v752, %v1576
    %1578 = vdwg.mxu0
    %1579 = vmatpush.bf16.msra.mxu0 %v1204
    %1580 = vmatpush.bf16.msra.mxu0 %v1200
    %1581 = vmatpush.bf16.msra.mxu0 %v1196
    %1582 = vmatpush.bf16.msra.mxu0 %v1192
    %1583 = vmatpush.bf16.msra.mxu0 %v1188
    %1584 = vmatpush.bf16.msra.mxu0 %v1184
    %1585 = vmatpush.bf16.msra.mxu0 %v1180
    %1586 = vmatpush.bf16.msra.mxu0 %v1176
    %1587 = vmatmul.bf16.gmra.mxu0 %v616
    %v1588 = vpop.f32.mrf.mxu0
    %v1589 = vadd.f32 %v1575, %v1588
    %v1590 = vpop.f32.mrf.mxu0
    %v1591 = vadd.f32 %v1577, %v1590
    %1592 = vdwg.mxu0
    %1593 = vmatpush.bf16.msra.mxu0 %v1236
    %1594 = vmatpush.bf16.msra.mxu0 %v1232
    %1595 = vmatpush.bf16.msra.mxu0 %v1228
    %1596 = vmatpush.bf16.msra.mxu0 %v1224
    %1597 = vmatpush.bf16.msra.mxu0 %v1220
    %1598 = vmatpush.bf16.msra.mxu0 %v1216
    %1599 = vmatpush.bf16.msra.mxu0 %v1212
    %1600 = vmatpush.bf16.msra.mxu0 %v1208
    %1601 = vmatmul.bf16.gmra.mxu0 %v617
    %v1602 = vpop.f32.mrf.mxu0
    %v1603 = vadd.f32 %v1589, %v1602
    %v1604 = vpop.f32.mrf.mxu0
    %v1605 = vadd.f32 %v1591, %v1604
    %1606 = vdwg.mxu0
    %1607 = vmatpush.bf16.msra.mxu0 %v1268
    %1608 = vmatpush.bf16.msra.mxu0 %v1264
    %1609 = vmatpush.bf16.msra.mxu0 %v1260
    %1610 = vmatpush.bf16.msra.mxu0 %v1256
    %1611 = vmatpush.bf16.msra.mxu0 %v1252
    %1612 = vmatpush.bf16.msra.mxu0 %v1248
    %1613 = vmatpush.bf16.msra.mxu0 %v1244
    %1614 = vmatpush.bf16.msra.mxu0 %v1240
    %1615 = vmatmul.bf16.gmra.mxu0 %v618
    %v1616 = vpop.f32.mrf.mxu0
    %v1617 = vadd.f32 %v1603, %v1616
    %v1618 = vpop.f32.mrf.mxu0
    %v1619 = vadd.f32 %v1605, %v1618
    %1620 = vdwg.mxu0
    %v1621 = vpack.c.bf16 %v1505, %v1449
    %v1622 = vpack.c.bf16 %v1617, %v1561
    %v1623 = vpack.c.bf16 %v1507, %v1451
    %v1624 = vpack.c.bf16 %v1619, %v1563
    %1625 = vst [vmem:[#allocation11] sm:$0xff] %v1621
    %1626 = vst [vmem:[#allocation11 + $0x8] sm:$0xff] %v1622
    %1627 = vst [vmem:[#allocation11 + $0x10] sm:$0xff] %v1623
    %1628 = vst [vmem:[#allocation11 + $0x18] sm:$0xff] %v1624
    // Predicated region
    $region42: #{toy_model_forward.1} parent=1 // pred_check
      _
    $region43: #{toy_model_forward.1} parent=1 // pred_check_branch
      %1630 = sbr.rel (0) target = $region45
    $region44: #{toy_model_forward.1} parent=1 // pred_region
      %1632 = vsyncadd [#allocation4], 256
      %s1633 = sshll.u32 [#allocation11], 4
      %s1634 = int_to_ptr.vmem [resolvable:$true] %s1633
      %s1635 = sshll.u32 %s5, 4
      %s1636 = int_to_ptr.hbm [resolvable:$true] %s1635
      %1641 = dma.vmem_to_hbm [thread:$0]  %s1634, 256, %s1636, [#allocation4], 256, 256, 16
    $region45: #{toy_model_forward.1} parent=1 // pred_fallthru
      _
    // Predicated region
    $region46: #{toy_model_forward.1} parent=1 // pred_check
      _
    $region47: #{toy_model_forward.1} parent=1 // pred_check_branch
      %1643 = sbr.rel (0) target = $region49
    $region48: #{toy_model_forward.1} parent=1 // pred_region
      %1645 = dma.done [#allocation4], 512
    $region49: #{toy_model_forward.1} parent=1 // pred_fallthru
      _
    %1646 = vsyncpa [#allocation3], 1
    %1647 = vsyncpa [#allocation6], 1
    %1648 = vsyncpa [#allocation9], 1
    %1649 = vsyncpa [#allocation4], 1

</llo_original>
